<compile_context>
chip_gen: v7x
topology: tpu7x:2x2x1
jax: 0.10.0
libtpu: 0.0.40
codegen_flags: <defaults>
</compile_context>

<pallas_src>
import functools

import jax
import jax.numpy as jnp
from jax.experimental import pallas as pl
from jax.experimental.pallas import tpu as pltpu


def _pointwise_conv1d_kernel(x_ref, w_ref, b_ref, o_ref):
    # x_ref: (NB, C_in, TL)   w_ref: (C_out, C_in)   b_ref: (C_out, 1)
    # o_ref: (NB, C_out, TL)
    nb = x_ref.shape[0]
    tl = x_ref.shape[2]
    c_out = w_ref.shape[0]

    w = w_ref[...]                                            # (C_out, C_in)
    # Hoist the bias broadcast once per tile (JAX does not CSE broadcasts).
    bias = jnp.broadcast_to(b_ref[...], (c_out, tl))          # (C_out, TL)

    # NB is small (<= 8); a static unrolled loop of clean 2-D MXU matmuls.
    for b in range(nb):
        y = jnp.dot(w, x_ref[b], preferred_element_type=jnp.float32)
        o_ref[b] = (y + bias).astype(o_ref.dtype)


def _largest_divisor_leq(n, cap):
    for d in range(min(n, cap), 0, -1):
        if n % d == 0:
            return d
    return 1


def _pick_length_tile(l_padded, max_bytes, bytes_per_len_col):
    # Largest multiple of 128 that divides l_padded and keeps a single
    # batch-element tile under max_bytes (never below 128).
    cap = max(128, (max_bytes // bytes_per_len_col) // 128 * 128)
    cap = min(cap, 2048, l_padded)
    for t in range(cap, 127, -128):
        if l_padded % t == 0:
            return t
    return 128


@functools.partial(jax.jit, static_argnames=("stride", "padding"))
def pointwise_conv1d(x, weight, bias, *, stride=1, padding=0):
    """Pointwise (kernel_size=1) Conv1d.

    x: (N, C_in, L) float32; weight: (C_out, C_in, 1); bias: (C_out,).
    stride / padding handled wrapper-side (kernel_size=1 => stride is just a
    subsampling of length positions, padding is zero-padding of L).
    """
    N, C_in, L = x.shape
    C_out = weight.shape[0]

    # ---- wrapper-side glue: padding / stride for kernel_size=1 conv ----
    if padding:
        x = jnp.pad(x, ((0, 0), (0, 0), (padding, padding)))
    if stride != 1:
        x = x[:, :, ::stride]
    L_out = x.shape[2]

    # Pad length to a multiple of 128 so output stores stay lane-dense.
    Lp = ((L_out + 127) // 128) * 128
    if Lp != L_out:
        x = jnp.pad(x, ((0, 0), (0, 0), (0, Lp - L_out)))

    w2d = weight.reshape(C_out, C_in)
    b2d = bias.reshape(C_out, 1)

    # ---- tile selection (bandwidth-bound; target ~0.5-2 MiB per step) ----
    TILE_MAX = 2 << 20                                  # 2 MiB per grid step
    bytes_per_len_col = (C_in + C_out) * 4              # f32 in + out per position
    TL = _pick_length_tile(Lp, TILE_MAX, bytes_per_len_col)
    per_elem_tile_bytes = bytes_per_len_col * TL
    nb_cap = min(max(1, TILE_MAX // per_elem_tile_bytes), 8, N)
    NB = _largest_divisor_leq(N, nb_cap)

    grid = (N // NB, Lp // TL)

    cost = pl.CostEstimate(
        flops=2 * N * C_out * C_in * Lp,
        transcendentals=0,
        bytes_accessed=(N * C_in * Lp + N * C_out * Lp + C_out * C_in + C_out) * 4,
    )

    out = pl.pallas_call(
        _pointwise_conv1d_kernel,
        out_shape=jax.ShapeDtypeStruct((N, C_out, Lp), x.dtype),
        grid_spec=pltpu.PrefetchScalarGridSpec(
            num_scalar_prefetch=0,
            grid=grid,
            in_specs=[
                pl.BlockSpec((NB, C_in, TL), lambda n, l: (n, 0, l)),
                pl.BlockSpec((C_out, C_in), lambda n, l: (0, 0)),
                pl.BlockSpec((C_out, 1), lambda n, l: (0, 0)),
            ],
            out_specs=pl.BlockSpec((NB, C_out, TL), lambda n, l: (n, 0, l)),
        ),
        compiler_params=pltpu.CompilerParams(
            dimension_semantics=("parallel", "parallel"),
        ),
        cost_estimate=cost,
    )(x, w2d, b2d)

    if Lp != L_out:
        out = out[:, :, :L_out]
    return out


if __name__ == "__main__":
    # Small shapes consistent with the module: batch=2, in_channels=8,
    # out_channels=16, sequence length=128 (lane-aligned).
    N, C_in, C_out, L = 2, 8, 16, 128

    key = jax.random.PRNGKey(0)
    kx, kw, kb = jax.random.split(key, 3)

    x = jax.random.normal(kx, (N, C_in, L), dtype=jnp.float32)
    # Parameter shapes match nn.Conv1d: weight (C_out, C_in, 1), bias (C_out,).
    weight = jax.random.normal(kw, (C_out, C_in, 1), dtype=jnp.float32) * 0.1
    bias = jax.random.normal(kb, (C_out,), dtype=jnp.float32) * 0.1

    out = pointwise_conv1d(x, weight, bias)
    out = jax.block_until_ready(out)

    # Reference check (plain JAX): pointwise conv == channel einsum + bias.
    ref = jnp.einsum("oc,ncl->nol", weight[:, :, 0], x) + bias[None, :, None]
    assert out.shape == (N, C_out, L)
    assert jnp.allclose(out, ref, atol=1e-5, rtol=1e-5)

    print("KERNEL_OK")
</pallas_src>

<mosaic_0001>
module attributes {stable_mosaic.version = 11 : i64} {
  func.func @_pointwise_conv1d_kernel(%arg0: i32, %arg1: i32, %arg2: memref<2x8x128xf32, #tpu.memory_space<vmem>>, %arg3: memref<16x8xf32, #tpu.memory_space<vmem>>, %arg4: memref<16x1xf32, #tpu.memory_space<vmem>>, %arg5: memref<2x16x128xf32, #tpu.memory_space<vmem>>) attributes {dimension_semantics = [#tpu.dimension_semantics<parallel>, #tpu.dimension_semantics<parallel>], iteration_bounds = array<i64: 1, 1>, scalar_prefetch = 0 : i64, scratch_operands = 0 : i64, tpu.core_type = #tpu.core_type<tc>, window_params = [{transform_indices = @transform_0, window_bounds = array<i64: 2, 8, 128>}, {pipeline_mode = #tpu.pipeline_mode<synchronous>, transform_indices = @transform_1, window_bounds = array<i64: 16, 8>}, {pipeline_mode = #tpu.pipeline_mode<synchronous>, transform_indices = @transform_2, window_bounds = array<i64: 16, 1>}, {transform_indices = @transform_3, window_bounds = array<i64: 2, 16, 128>}]} {
    %c0 = arith.constant 0 : index
    %c0_0 = arith.constant 0 : index
    %0 = vector.load %arg3[%c0, %c0_0] : memref<16x8xf32, #tpu.memory_space<vmem>>, vector<16x8xf32>
    %c0_1 = arith.constant 0 : index
    %c0_2 = arith.constant 0 : index
    %1 = vector.load %arg4[%c0_1, %c0_2] : memref<16x1xf32, #tpu.memory_space<vmem>>, vector<16x1xf32>
    %2 = vector.shape_cast %1 : vector<16x1xf32> to vector<16x1xf32>
    %3 = vector.broadcast %2 : vector<16x1xf32> to vector<16x128xf32>
    %c0_3 = arith.constant 0 : index
    %c0_4 = arith.constant 0 : index
    %c0_5 = arith.constant 0 : index
    %4 = vector.load %arg2[%c0_3, %c0_4, %c0_5] : memref<2x8x128xf32, #tpu.memory_space<vmem>>, vector<1x8x128xf32>
    %5 = vector.shape_cast %4 : vector<1x8x128xf32> to vector<8x128xf32>
    %cst = arith.constant dense<0.000000e+00> : vector<16x128xf32>
    %6 = tpu.matmul %0, %5, %cst {dimension_numbers = #tpu.dot_dimension_numbers<[1], [0], [0], [1], [0, 0, 1, 1], [], []>} : vector<16x8xf32>, vector<8x128xf32>, vector<16x128xf32> -> vector<16x128xf32>
    %7 = arith.addf %6, %3 : vector<16x128xf32>
    %c0_6 = arith.constant 0 : index
    %c0_7 = arith.constant 0 : index
    %c0_8 = arith.constant 0 : index
    %8 = vector.load %arg5[%c0_6, %c0_7, %c0_8] : memref<2x16x128xf32, #tpu.memory_space<vmem>>, vector<1x16x128xf32>
    %9 = vector.shape_cast %8 : vector<1x16x128xf32> to vector<16x128xf32>
    %10 = vector.shape_cast %7 : vector<16x128xf32> to vector<1x16x128xf32>
    tpu.vector_store %arg5[%c0_6, %c0_7, %c0_8], %10 {strides = array<i32>} : memref<2x16x128xf32, #tpu.memory_space<vmem>>, vector<1x16x128xf32>,
    %c1 = arith.constant 1 : index
    %c0_9 = arith.constant 0 : index
    %c0_10 = arith.constant 0 : index
    %11 = vector.load %arg2[%c1, %c0_9, %c0_10] : memref<2x8x128xf32, #tpu.memory_space<vmem>>, vector<1x8x128xf32>
    %12 = vector.shape_cast %11 : vector<1x8x128xf32> to vector<8x128xf32>
    %cst_11 = arith.constant dense<0.000000e+00> : vector<16x128xf32>
    %13 = tpu.matmul %0, %12, %cst_11 {dimension_numbers = #tpu.dot_dimension_numbers<[1], [0], [0], [1], [0, 0, 1, 1], [], []>} : vector<16x8xf32>, vector<8x128xf32>, vector<16x128xf32> -> vector<16x128xf32>
    %14 = arith.addf %13, %3 : vector<16x128xf32>
    %c1_12 = arith.constant 1 : index
    %c0_13 = arith.constant 0 : index
    %c0_14 = arith.constant 0 : index
    %15 = vector.load %arg5[%c1_12, %c0_13, %c0_14] : memref<2x16x128xf32, #tpu.memory_space<vmem>>, vector<1x16x128xf32>
    %16 = vector.shape_cast %15 : vector<1x16x128xf32> to vector<16x128xf32>
    %17 = vector.shape_cast %14 : vector<16x128xf32> to vector<1x16x128xf32>
    tpu.vector_store %arg5[%c1_12, %c0_13, %c0_14], %17 {strides = array<i32>} : memref<2x16x128xf32, #tpu.memory_space<vmem>>, vector<1x16x128xf32>,
    return
  }
  func.func @transform_0(%arg0: i32, %arg1: i32) -> (i32, i32, i32) {
    %c0_i32 = arith.constant 0 : i32
    %c0_i32_0 = arith.constant 0 : i32
    return %arg0, %c0_i32, %arg1 : i32, i32, i32
  }
  func.func @transform_1(%arg0: i32, %arg1: i32) -> (i32, i32) {
    %c0_i32 = arith.constant 0 : i32
    %c0_i32_0 = arith.constant 0 : i32
    %c0_i32_1 = arith.constant 0 : i32
    return %c0_i32, %c0_i32_0 : i32, i32
  }
  func.func @transform_2(%arg0: i32, %arg1: i32) -> (i32, i32) {
    %c0_i32 = arith.constant 0 : i32
    %c0_i32_0 = arith.constant 0 : i32
    %c0_i32_1 = arith.constant 0 : i32
    return %c0_i32, %c0_i32_0 : i32, i32
  }
  func.func @transform_3(%arg0: i32, %arg1: i32) -> (i32, i32, i32) {
    %c0_i32 = arith.constant 0 : i32
    %c0_i32_0 = arith.constant 0 : i32
    return %arg0, %c0_i32, %arg1 : i32, i32, i32
  }
}

</mosaic_0001>

<llo_original>
// kernel: pointwise_conv1d.1
$region0: #{pointwise_conv1d.1}
  #allocation0 [shape = 'u32[]', space=smem, size = 0x4, offset = 0x4, fixed_abs, tag = 'smem constant byte address 0x4 - core index']
  #allocation1 [shape = 'u32[144,128]{1,0:T(1,128)}', space=vmem, size = 0x12000, scoped, tag = 'internal scratch']
  %s0 = inlined_call_operand.vmem [shape: f32[2,8,128], index: 0, kind: input, shape index: {}]
  %s1 = inlined_call_operand.vmem [shape: f32[16,8], index: 1, kind: input, shape index: {}]
  %s2 = inlined_call_operand.vmem [shape: f32[16,1], index: 2, kind: input, shape index: {}]
  %s3 = inlined_call_operand.hbm [shape: f32[2,16,128], index: 3, kind: output, shape index: {}]
  %s4 = sld [smem:[#allocation0]]
  $region22: #{pointwise_conv1d.1} parent=0
    _
  %s6 = ssub.s32 1, %s4
  %s7 = scalar_select 0, %s6, %s4
  $region1: #{pointwise_conv1d.1} parent=0
    #allocation2 [shape = 'u8[16384]{0}', space=vmem, size = 0x4000, scoped, tag = 'output window, operand 0, single buffered']
    #allocation3 [shape = 's32[1]{0}', space=sflag, size = 0x4, scoped, tag = 'scoped memory for pointwise_conv1d.1']
    %8 = vsyncpa [#allocation3], 0
    // Predicated region
    $region2: #{pointwise_conv1d.1} parent=1 // pred_check
      _
    $region3: #{pointwise_conv1d.1} parent=1 // pred_check_branch
      %10 = sbr.rel (0) target = $region5
    $region4: #{pointwise_conv1d.1} parent=1 // pred_region
      _
    $region5: #{pointwise_conv1d.1} parent=1 // pred_fallthru
      _
    // Predicated region
    $region6: #{pointwise_conv1d.1} parent=1 // pred_check
      _
    $region7: #{pointwise_conv1d.1} parent=1 // pred_check_branch
      %12 = sbr.rel (0) target = $region9
    $region8: #{pointwise_conv1d.1} parent=1 // pred_region
      _
    $region9: #{pointwise_conv1d.1} parent=1 // pred_fallthru
      _
    // Predicated region
    $region10: #{pointwise_conv1d.1} parent=1 // pred_check
      _
    $region11: #{pointwise_conv1d.1} parent=1 // pred_check_branch
      %14 = sbr.rel (0) target = $region13
    $region12: #{pointwise_conv1d.1} parent=1 // pred_region
      _
    $region13: #{pointwise_conv1d.1} parent=1 // pred_fallthru
      _
    %v15 = vld [vmem:[%s1] sm:$0xff]
    %v16 = vld [vmem:[%s1 + $0x8] sm:$0xff]
    %v17 = vld [vmem:[%s2] sm:$0xff]
    %v18 = vld [vmem:[%s2 + $0x8] sm:$0xff]
    %20 = vset.pattern.permute.xlu0 0
    %21 = vperm.xlu0 %20, %v17
    %v22 = vpop.permute.xlu0 %21
    %25 = vset.pattern.permute.xlu0 0
    %26 = vperm.xlu0 %25, %v18
    %v27 = vpop.permute.xlu0 %26
    %v29 = vld [vmem:[%s0] sm:$0xff]
    %vm30 = vcmask 64512
    %v32 = vsel %vm30, %v15, 0
    %v35 = vsel %vm30, %v16, 0
    %37 = vmatprep.subr.mxu0 0.0
    %38 = vmatpush1.msra.mxu0 %v29
    %39 = vmatprep.subr.mxu0 0.0
    %40 = vmatpush1.msra.mxu0 0.0
    %41 = vmatprep.subr.mxu0 0.0
    %42 = vmatpush1.msra.mxu0 0.0
    %43 = vmatprep.subr.mxu0 0.0
    %44 = vmatpush1.msra.mxu0 0.0
    %45 = vmatprep.subr.mxu0 0.0
    %46 = vmatpush1.msra.mxu0 0.0
    %47 = vmatprep.subr.mxu0 0.0
    %48 = vmatpush1.msra.mxu0 0.0
    %49 = vmatprep.subr.mxu0 0.0
    %50 = vmatpush1.msra.mxu0 0.0
    %51 = vmatprep.subr.mxu0 0.0
    %52 = vmatpush1.msra.mxu0 0.0
    %53 = vmatprep.subr.mxu0 0.0
    %54 = vmatpush1.msra.mxu0 0.0
    %55 = vmatprep.subr.mxu0 0.0
    %56 = vmatpush1.msra.mxu0 0.0
    %57 = vmatprep.subr.mxu0 0.0
    %58 = vmatpush1.msra.mxu0 0.0
    %59 = vmatprep.subr.mxu0 0.0
    %60 = vmatpush1.msra.mxu0 0.0
    %61 = vmatprep.subr.mxu0 0.0
    %62 = vmatpush1.msra.mxu0 0.0
    %63 = vmatprep.subr.mxu0 0.0
    %64 = vmatpush1.msra.mxu0 0.0
    %65 = vmatprep.subr.mxu0 0.0
    %66 = vmatpush1.msra.mxu0 0.0
    %67 = vmatprep.subr.mxu0 0.0
    %68 = vmatpush1.msra.mxu0 0.0
    %69 = vmatprep.subr.mxu0 0.0
    %70 = vmatpush1.msra.mxu0 0.0
    %71 = vmatprep.subr.mxu0 0.0
    %72 = vmatpush1.msra.mxu0 0.0
    %73 = vmatprep.subr.mxu0 0.0
    %74 = vmatpush1.msra.mxu0 0.0
    %75 = vmatprep.subr.mxu0 0.0
    %76 = vmatpush1.msra.mxu0 0.0
    %77 = vmatprep.subr.mxu0 0.0
    %78 = vmatpush1.msra.mxu0 0.0
    %79 = vmatprep.subr.mxu0 0.0
    %80 = vmatpush1.msra.mxu0 0.0
    %81 = vmatprep.subr.mxu0 0.0
    %82 = vmatpush1.msra.mxu0 0.0
    %83 = vmatprep.subr.mxu0 0.0
    %84 = vmatpush1.msra.mxu0 0.0
    %85 = vmatprep.subr.mxu0 0.0
    %86 = vmatpush1.msra.mxu0 0.0
    %87 = vmatprep.subr.mxu0 0.0
    %88 = vmatpush1.msra.mxu0 0.0
    %89 = vmatprep.subr.mxu0 0.0
    %90 = vmatpush1.msra.mxu0 0.0
    %91 = vmatprep.subr.mxu0 0.0
    %92 = vmatpush1.msra.mxu0 0.0
    %93 = vmatprep.subr.mxu0 0.0
    %94 = vmatpush1.msra.mxu0 0.0
    %95 = vmatprep.subr.mxu0 0.0
    %96 = vmatpush1.msra.mxu0 0.0
    %97 = vmatprep.subr.mxu0 0.0
    %98 = vmatpush1.msra.mxu0 0.0
    %99 = vmatprep.subr.mxu0 0.0
    %100 = vmatpush1.msra.mxu0 0.0
    %101 = vmatprep.mubr.f32.mxu0 0.0
    %102 = vmatmul.mubr.f32.gmra.mrb[0].mxu0 %v32
    %v103 = vpop.f32.mrb[0].mxu0
    %v104 = vadd.f32 %v22, %v103
    %v105 = vpop.f32.mrb[0].mxu0
    %106 = vmatprep.mubr.f32.mxu0 0.0
    %107 = vmatmul.mubr.f32.gmra.mrb[0].mxu0 %v35
    %v108 = vpop.f32.mrb[0].mxu0
    %v109 = vadd.f32 %v27, %v108
    %v110 = vpop.f32.mrb[0].mxu0
    %111 = vdwg.mxu0
    %112 = vst [vmem:[#allocation2] sm:$0xff] %v104
    %113 = vst [vmem:[#allocation2 + $0x8] sm:$0xff] %v109
    %s114 = scalar_lea.vmem %s0, 8
    %v115 = vld [vmem:[%s114] sm:$0xff]
    %116 = vmatprep.subr.mxu0 0.0
    %117 = vmatpush1.msra.mxu0 %v115
    %118 = vmatprep.subr.mxu0 0.0
    %119 = vmatpush1.msra.mxu0 0.0
    %120 = vmatprep.subr.mxu0 0.0
    %121 = vmatpush1.msra.mxu0 0.0
    %122 = vmatprep.subr.mxu0 0.0
    %123 = vmatpush1.msra.mxu0 0.0
    %124 = vmatprep.subr.mxu0 0.0
    %125 = vmatpush1.msra.mxu0 0.0
    %126 = vmatprep.subr.mxu0 0.0
    %127 = vmatpush1.msra.mxu0 0.0
    %128 = vmatprep.subr.mxu0 0.0
    %129 = vmatpush1.msra.mxu0 0.0
    %130 = vmatprep.subr.mxu0 0.0
    %131 = vmatpush1.msra.mxu0 0.0
    %132 = vmatprep.subr.mxu0 0.0
    %133 = vmatpush1.msra.mxu0 0.0
    %134 = vmatprep.subr.mxu0 0.0
    %135 = vmatpush1.msra.mxu0 0.0
    %136 = vmatprep.subr.mxu0 0.0
    %137 = vmatpush1.msra.mxu0 0.0
    %138 = vmatprep.subr.mxu0 0.0
    %139 = vmatpush1.msra.mxu0 0.0
    %140 = vmatprep.subr.mxu0 0.0
    %141 = vmatpush1.msra.mxu0 0.0
    %142 = vmatprep.subr.mxu0 0.0
    %143 = vmatpush1.msra.mxu0 0.0
    %144 = vmatprep.subr.mxu0 0.0
    %145 = vmatpush1.msra.mxu0 0.0
    %146 = vmatprep.subr.mxu0 0.0
    %147 = vmatpush1.msra.mxu0 0.0
    %148 = vmatprep.subr.mxu0 0.0
    %149 = vmatpush1.msra.mxu0 0.0
    %150 = vmatprep.subr.mxu0 0.0
    %151 = vmatpush1.msra.mxu0 0.0
    %152 = vmatprep.subr.mxu0 0.0
    %153 = vmatpush1.msra.mxu0 0.0
    %154 = vmatprep.subr.mxu0 0.0
    %155 = vmatpush1.msra.mxu0 0.0
    %156 = vmatprep.subr.mxu0 0.0
    %157 = vmatpush1.msra.mxu0 0.0
    %158 = vmatprep.subr.mxu0 0.0
    %159 = vmatpush1.msra.mxu0 0.0
    %160 = vmatprep.subr.mxu0 0.0
    %161 = vmatpush1.msra.mxu0 0.0
    %162 = vmatprep.subr.mxu0 0.0
    %163 = vmatpush1.msra.mxu0 0.0
    %164 = vmatprep.subr.mxu0 0.0
    %165 = vmatpush1.msra.mxu0 0.0
    %166 = vmatprep.subr.mxu0 0.0
    %167 = vmatpush1.msra.mxu0 0.0
    %168 = vmatprep.subr.mxu0 0.0
    %169 = vmatpush1.msra.mxu0 0.0
    %170 = vmatprep.subr.mxu0 0.0
    %171 = vmatpush1.msra.mxu0 0.0
    %172 = vmatprep.subr.mxu0 0.0
    %173 = vmatpush1.msra.mxu0 0.0
    %174 = vmatprep.subr.mxu0 0.0
    %175 = vmatpush1.msra.mxu0 0.0
    %176 = vmatprep.subr.mxu0 0.0
    %177 = vmatpush1.msra.mxu0 0.0
    %178 = vmatprep.subr.mxu0 0.0
    %179 = vmatpush1.msra.mxu0 0.0
    %180 = vmatprep.mubr.f32.mxu0 0.0
    %181 = vmatmul.mubr.f32.gmra.mrb[0].mxu0 %v32
    %v182 = vpop.f32.mrb[0].mxu0
    %v183 = vadd.f32 %v22, %v182
    %v184 = vpop.f32.mrb[0].mxu0
    %185 = vmatprep.mubr.f32.mxu0 0.0
    %186 = vmatmul.mubr.f32.gmra.mrb[0].mxu0 %v35
    %v187 = vpop.f32.mrb[0].mxu0
    %v188 = vadd.f32 %v27, %v187
    %v189 = vpop.f32.mrb[0].mxu0
    %190 = vdwg.mxu0
    %s191 = scalar_lea.vmem [#allocation2], 16
    %192 = vst [vmem:[%s191] sm:$0xff] %v183
    %193 = vst [vmem:[%s191 + $0x8] sm:$0xff] %v188
    // Predicated region
    $region14: #{pointwise_conv1d.1} parent=1 // pred_check
      _
    $region15: #{pointwise_conv1d.1} parent=1 // pred_check_branch
      %195 = sbr.rel (0) target = $region17
    $region16: #{pointwise_conv1d.1} parent=1 // pred_region
      %s197 = ssub.s32 512, 512
      %198 = vsyncadd [#allocation3], %s197
      %s199 = sshll.u32 [#allocation2], 4
      %s200 = int_to_ptr.vmem [resolvable:$true] %s199
      %205 = dma.vmem_to_hbm [thread:$0]  %s200, 512, %s3, [#allocation3], 128, 128, 8
    $region17: #{pointwise_conv1d.1} parent=1 // pred_fallthru
      _
    // Predicated region
    $region18: #{pointwise_conv1d.1} parent=1 // pred_check
      _
    $region19: #{pointwise_conv1d.1} parent=1 // pred_check_branch
      %207 = sbr.rel (0) target = $region21
    $region20: #{pointwise_conv1d.1} parent=1 // pred_region
      %208 = dma.done [#allocation3], 512
    $region21: #{pointwise_conv1d.1} parent=1 // pred_fallthru
      _
    %209 = vsyncpa [#allocation3], 1

</llo_original>
